<compile_context>
chip_gen: v7x
topology: tpu7x:2x2x1
jax: 0.10.0
libtpu: 0.0.40
codegen_flags: <defaults>
</compile_context>

<pallas_src>
import functools

import jax
import jax.numpy as jnp
from jax.experimental import pallas as pl
from jax.experimental.pallas import tpu as pltpu

BN_EPS = 1e-5
NORM_EPS = 1e-8


def _round_up(n, m):
    return ((n + m - 1) // m) * m


def _vmem_capacity_bytes():
    try:
        return int(pltpu.get_tpu_info().vmem_capacity_bytes)
    except Exception:
        return 128 << 20  # conservative fallback (v5e/v6e size)


def fc_classblock_kernel(x_ref, w1_ref, b1_ref, w2_ref, b2_ref,
                         logits_ref, f_ref, y_ref):
    """Grid = (batch tiles, classifier-column tiles).

    n == 0 : y = x @ w1' + b1' (BN folded), f = y * rsqrt(||y||^2 + eps^2),
             y stashed in VMEM scratch.
    all n  : logits[:, n-tile] = y @ w2[:, n-tile] + b2[n-tile].
    """
    n = pl.program_id(1)

    @pl.when(n == 0)
    def _():
        xt = x_ref[...].astype(w1_ref.dtype)              # cast hidden under MXU
        y = jnp.dot(xt, w1_ref[...],
                    preferred_element_type=jnp.float32) + b1_ref[...]
        y_ref[...] = y
        # f = y / (||y||_2 + 1e-8); single EUP rsqrt (eps semantics change is
        # ~1e-9 relative for non-degenerate rows, still safe at ||y|| -> 0).
        sumsq = jnp.sum(y * y, axis=1, keepdims=True)
        inv_norm = jax.lax.rsqrt(sumsq + NORM_EPS * NORM_EPS)
        f_ref[...] = (y * inv_norm).astype(f_ref.dtype)

    y = y_ref[...]
    logits = jnp.dot(y.astype(w2_ref.dtype), w2_ref[...],
                     preferred_element_type=jnp.float32) + b2_ref[...]
    logits_ref[...] = logits.astype(logits_ref.dtype)


@functools.partial(jax.jit,
                   static_argnames=("compute_dtype", "block_b", "block_n"))
def fc_classblock(x, w1, b1, gamma, beta, running_mean, running_var, w2, b2,
                  *, compute_dtype=jnp.bfloat16, block_b=512, block_n=512):
    """x: (B, D_in); w1: (D_in, D_b); w2: (D_b, C); 1-D BN/bias params."""
    B, D_in = x.shape
    D_b = w1.shape[1]
    C = w2.shape[1]
    itm = jnp.dtype(compute_dtype).itemsize
    x_itm = jnp.dtype(x.dtype).itemsize
    f_dtype = compute_dtype

    # ---- Fold eval-mode BatchNorm into Linear 1 (exact fold done in f32) ----
    scale = gamma.astype(jnp.float32) * jax.lax.rsqrt(
        running_var.astype(jnp.float32) + BN_EPS)                       # (D_b,)
    w1f = (w1.astype(jnp.float32) * scale[None, :]).astype(compute_dtype)
    b1f = ((b1.astype(jnp.float32) - running_mean.astype(jnp.float32)) * scale
           + beta.astype(jnp.float32)).reshape(1, D_b)                  # f32

    # ---- Classifier column tiling (lane-dense; N-tiled only when w2 is big) --
    c_pad = _round_up(C, 128)
    if 2 * c_pad * D_b * itm > (16 << 20):       # double-buffered w2 too large
        tn = min(block_n, c_pad)
        c_pad = _round_up(C, tn)
    else:
        tn = c_pad
    w2f = jnp.pad(w2.astype(compute_dtype), ((0, 0), (0, c_pad - C)))
    b2f = jnp.pad(b2.astype(jnp.float32), (0, c_pad - C)).reshape(1, c_pad)

    # ---- Batch tiling (x stays in native dtype; cast happens in-kernel) ------
    tm = min(block_b, _round_up(B, 8))
    b_pad = _round_up(B, tm)
    if b_pad // tm < 2 and b_pad >= 256:
        # Guarantee >=2 batch tiles so both v7x TensorCores get work.
        tm = _round_up((b_pad + 1) // 2, 8)
        b_pad = _round_up(B, tm)
    xp = x if b_pad == B else jnp.pad(x, ((0, b_pad - B), (0, 0)))

    grid = (b_pad // tm, c_pad // tn)

    # ---- VMEM budget: 2 buffers per BlockSpec operand (incl. resident ones) --
    vmem_need = (2 * (w1f.size * itm + b1f.size * 4)        # w1, b1
                 + 2 * (D_b * tn * itm + tn * 4)            # w2 / b2 tiles
                 + 2 * tm * D_in * x_itm                    # x tile
                 + 2 * tm * tn * 4                          # logits tile
                 + 2 * tm * D_b * jnp.dtype(f_dtype).itemsize   # f tile
                 + tm * D_b * 4)                            # y scratch
    cap = _vmem_capacity_bytes()
    hard_cap = min(cap - (8 << 20), 100 << 20)               # generation-aware
    vmem_limit = int(min(max(vmem_need + (4 << 20), 32 << 20), hard_cap))

    flops = 2 * b_pad * D_in * D_b + 2 * b_pad * D_b * c_pad + 3 * b_pad * D_b
    bytes_accessed = (xp.size * x_itm + w1f.size * itm + w2f.size * itm
                      + (b1f.size + b2f.size) * 4
                      + b_pad * c_pad * 4
                      + b_pad * D_b * jnp.dtype(f_dtype).itemsize)

    logits_p, f_p = pl.pallas_call(
        fc_classblock_kernel,
        out_shape=(
            jax.ShapeDtypeStruct((b_pad, c_pad), jnp.float32),
            jax.ShapeDtypeStruct((b_pad, D_b), f_dtype),
        ),
        grid=grid,
        in_specs=[
            pl.BlockSpec((tm, D_in), lambda i, n: (i, 0)),    # x (native dtype)
            pl.BlockSpec((D_in, D_b), lambda i, n: (0, 0)),   # w1 (resident)
            pl.BlockSpec((1, D_b), lambda i, n: (0, 0)),      # b1 (BN folded)
            pl.BlockSpec((D_b, tn), lambda i, n: (0, n)),     # w2 column tile
            pl.BlockSpec((1, tn), lambda i, n: (0, n)),       # b2 column tile
        ],
        out_specs=(
            pl.BlockSpec((tm, tn), lambda i, n: (i, n)),      # logits tile
            pl.BlockSpec((tm, D_b), lambda i, n: (i, 0)),     # f (written n==0)
        ),
        scratch_shapes=[pltpu.VMEM((tm, D_b), jnp.float32)],  # y cached over n
        compiler_params=pltpu.CompilerParams(
            dimension_semantics=("parallel", "arbitrary"),
            vmem_limit_bytes=vmem_limit,
        ),
        cost_estimate=pl.CostEstimate(
            flops=flops, transcendentals=b_pad, bytes_accessed=bytes_accessed),
    )(xp, w1f, b1f, w2f, b2f)

    logits = logits_p if (b_pad == B and c_pad == C) else logits_p[:B, :C]
    f = f_p if b_pad == B else f_p[:B, :]
    return logits, f


def init_params(key, input_dim, num_bottleneck, class_num):
    k1, k2, k3 = jax.random.split(key, 3)
    # weights_init_kaiming for Linear: kaiming_normal_ fan_out -> std=sqrt(2/fan_out)
    w1 = jax.random.normal(k1, (input_dim, num_bottleneck), jnp.float32) * jnp.sqrt(
        2.0 / num_bottleneck)
    b1 = jnp.zeros((num_bottleneck,), jnp.float32)
    # BatchNorm: gamma ~ N(1, 0.02), beta = 0; running stats: mean=0, var=1
    gamma = 1.0 + 0.02 * jax.random.normal(k2, (num_bottleneck,), jnp.float32)
    beta = jnp.zeros((num_bottleneck,), jnp.float32)
    running_mean = jnp.zeros((num_bottleneck,), jnp.float32)
    running_var = jnp.ones((num_bottleneck,), jnp.float32)
    # weights_init_classifier: std = 0.001, bias = 0
    w2 = 0.001 * jax.random.normal(k3, (num_bottleneck, class_num), jnp.float32)
    b2 = jnp.zeros((class_num,), jnp.float32)
    return w1, b1, gamma, beta, running_mean, running_var, w2, b2


def reference(x, w1, b1, gamma, beta, mean, var, w2, b2):
    h = x @ w1 + b1
    y = gamma * (h - mean) / jnp.sqrt(var + BN_EPS) + beta
    f = y / (jnp.linalg.norm(y, axis=1, keepdims=True) + NORM_EPS)
    logits = y @ w2 + b2
    return logits, f


if __name__ == "__main__":
    B, D_IN, D_B, C = 8, 64, 128, 16

    key = jax.random.PRNGKey(0)
    kx, kp = jax.random.split(key)
    x = jax.random.normal(kx, (B, D_IN), jnp.float32)
    params = init_params(kp, D_IN, D_B, C)

    ref_logits, ref_f = reference(x, *params)

    # f32 compute path (tight check).
    logits32, f32_ = fc_classblock(x, *params, compute_dtype=jnp.float32)
    jax.block_until_ready((logits32, f32_))
    assert logits32.shape == (B, C) and f32_.shape == (B, D_B)
    assert jnp.allclose(logits32, ref_logits, atol=2e-3, rtol=2e-3)
    assert jnp.allclose(f32_, ref_f, atol=2e-3, rtol=2e-3)

    # bf16 matmul-operand path (default; f32 accumulation, bf16 f output).
    logits_bf, f_bf = fc_classblock(x, *params)
    jax.block_until_ready((logits_bf, f_bf))
    assert logits_bf.shape == (B, C) and f_bf.shape == (B, D_B)
    assert jnp.allclose(logits_bf, ref_logits, atol=5e-2, rtol=5e-2)
    assert jnp.allclose(f_bf.astype(jnp.float32), ref_f, atol=5e-2, rtol=5e-2)

    print("KERNEL_OK")
</pallas_src>

<mosaic_0001>
module attributes {stable_mosaic.version = 11 : i64} {
  func.func @fc_classblock_kernel(%arg0: i32, %arg1: i32, %arg2: memref<8x64xf32, #tpu.memory_space<vmem>>, %arg3: memref<64x128xf32, #tpu.memory_space<vmem>>, %arg4: memref<1x128xf32, #tpu.memory_space<vmem>>, %arg5: memref<128x128xf32, #tpu.memory_space<vmem>>, %arg6: memref<1x128xf32, #tpu.memory_space<vmem>>, %arg7: memref<8x128xf32, #tpu.memory_space<vmem>>, %arg8: memref<8x128xf32, #tpu.memory_space<vmem>>, %arg9: memref<8x128xf32, #tpu.memory_space<vmem>>) attributes {dimension_semantics = [#tpu.dimension_semantics<parallel>, #tpu.dimension_semantics<arbitrary>], iteration_bounds = array<i64: 1, 1>, scalar_prefetch = 0 : i64, scratch_operands = 1 : i64, tpu.core_type = #tpu.core_type<tc>, window_params = [{transform_indices = @transform_0, window_bounds = array<i64: 8, 64>}, {pipeline_mode = #tpu.pipeline_mode<synchronous>, transform_indices = @transform_1, window_bounds = array<i64: 64, 128>}, {pipeline_mode = #tpu.pipeline_mode<synchronous>, transform_indices = @transform_2, window_bounds = array<i64: 1, 128>}, {transform_indices = @transform_3, window_bounds = array<i64: 128, 128>}, {transform_indices = @transform_4, window_bounds = array<i64: 1, 128>}, {transform_indices = @transform_5, window_bounds = array<i64: 8, 128>}, {transform_indices = @transform_6, window_bounds = array<i64: 8, 128>}]} {
    %c0_i32 = arith.constant 0 : i32
    %0 = arith.cmpi eq, %arg1, %c0_i32 : i32
    %1 = arith.extui %0 : i1 to i32
    %c0_i32_0 = arith.constant 0 : i32
    %2 = arith.cmpi ne, %1, %c0_i32_0 : i32
    scf.if %2 {
      %c0_8 = arith.constant 0 : index
      %c0_9 = arith.constant 0 : index
      %10 = vector.load %arg2[%c0_8, %c0_9] : memref<8x64xf32, #tpu.memory_space<vmem>>, vector<8x64xf32>
      %c0_10 = arith.constant 0 : index
      %c0_11 = arith.constant 0 : index
      %11 = vector.load %arg3[%c0_10, %c0_11] : memref<64x128xf32, #tpu.memory_space<vmem>>, vector<64x128xf32>
      %cst_12 = arith.constant dense<0.000000e+00> : vector<8x128xf32>
      %12 = tpu.matmul %10, %11, %cst_12 {dimension_numbers = #tpu.dot_dimension_numbers<[1], [0], [0], [1], [0, 0, 1, 1], [], []>} : vector<8x64xf32>, vector<64x128xf32>, vector<8x128xf32> -> vector<8x128xf32>
      %c0_13 = arith.constant 0 : index
      %c0_14 = arith.constant 0 : index
      %13 = vector.load %arg4[%c0_13, %c0_14] : memref<1x128xf32, #tpu.memory_space<vmem>>, vector<1x128xf32>
      %14 = vector.broadcast %13 : vector<1x128xf32> to vector<8x128xf32>
      %15 = arith.addf %12, %14 : vector<8x128xf32>
      %c0_15 = arith.constant 0 : index
      %c0_16 = arith.constant 0 : index
      %16 = vector.load %arg9[%c0_15, %c0_16] : memref<8x128xf32, #tpu.memory_space<vmem>>, vector<8x128xf32>
      tpu.vector_store %arg9[%c0_15, %c0_16], %15 {strides = array<i32>} : memref<8x128xf32, #tpu.memory_space<vmem>>, vector<8x128xf32>,
      %17 = arith.mulf %15, %15 : vector<8x128xf32>
      %cst_17 = arith.constant dense<0.000000e+00> : vector<8xf32>
      %18 = vector.multi_reduction <add>, %17, %cst_17 [1] : vector<8x128xf32> to vector<8xf32>
      %19 = vector.shape_cast %18 : vector<8xf32> to vector<8x1xf32>
      %cst_18 = arith.constant 1.000000e-16 : f32
      %20 = vector.broadcast %cst_18 : f32 to vector<8x1xf32>
      %21 = arith.addf %19, %20 : vector<8x1xf32>
      %22 = math.rsqrt %21 : vector<8x1xf32>
      %23 = vector.broadcast %22 : vector<8x1xf32> to vector<8x128xf32>
      %24 = arith.mulf %15, %23 : vector<8x128xf32>
      %c0_19 = arith.constant 0 : index
      %c0_20 = arith.constant 0 : index
      %25 = vector.load %arg8[%c0_19, %c0_20] : memref<8x128xf32, #tpu.memory_space<vmem>>, vector<8x128xf32>
      tpu.vector_store %arg8[%c0_19, %c0_20], %24 {strides = array<i32>} : memref<8x128xf32, #tpu.memory_space<vmem>>, vector<8x128xf32>,
    } else {
    }
    %c0 = arith.constant 0 : index
    %c0_1 = arith.constant 0 : index
    %3 = vector.load %arg9[%c0, %c0_1] : memref<8x128xf32, #tpu.memory_space<vmem>>, vector<8x128xf32>
    %c0_2 = arith.constant 0 : index
    %c0_3 = arith.constant 0 : index
    %4 = vector.load %arg5[%c0_2, %c0_3] : memref<128x128xf32, #tpu.memory_space<vmem>>, vector<128x128xf32>
    %cst = arith.constant dense<0.000000e+00> : vector<8x128xf32>
    %5 = tpu.matmul %3, %4, %cst {dimension_numbers = #tpu.dot_dimension_numbers<[1], [0], [0], [1], [0, 0, 1, 1], [], []>} : vector<8x128xf32>, vector<128x128xf32>, vector<8x128xf32> -> vector<8x128xf32>
    %c0_4 = arith.constant 0 : index
    %c0_5 = arith.constant 0 : index
    %6 = vector.load %arg6[%c0_4, %c0_5] : memref<1x128xf32, #tpu.memory_space<vmem>>, vector<1x128xf32>
    %7 = vector.broadcast %6 : vector<1x128xf32> to vector<8x128xf32>
    %8 = arith.addf %5, %7 : vector<8x128xf32>
    %c0_6 = arith.constant 0 : index
    %c0_7 = arith.constant 0 : index
    %9 = vector.load %arg7[%c0_6, %c0_7] : memref<8x128xf32, #tpu.memory_space<vmem>>, vector<8x128xf32>
    tpu.vector_store %arg7[%c0_6, %c0_7], %8 {strides = array<i32>} : memref<8x128xf32, #tpu.memory_space<vmem>>, vector<8x128xf32>,
    return
  }
  func.func @transform_0(%arg0: i32, %arg1: i32) -> (i32, i32) {
    %c0_i32 = arith.constant 0 : i32
    %c0_i32_0 = arith.constant 0 : i32
    return %arg0, %c0_i32 : i32, i32
  }
  func.func @transform_1(%arg0: i32, %arg1: i32) -> (i32, i32) {
    %c0_i32 = arith.constant 0 : i32
    %c0_i32_0 = arith.constant 0 : i32
    %c0_i32_1 = arith.constant 0 : i32
    return %c0_i32, %c0_i32_0 : i32, i32
  }
  func.func @transform_2(%arg0: i32, %arg1: i32) -> (i32, i32) {
    %c0_i32 = arith.constant 0 : i32
    %c0_i32_0 = arith.constant 0 : i32
    %c0_i32_1 = arith.constant 0 : i32
    return %c0_i32, %c0_i32_0 : i32, i32
  }
  func.func @transform_3(%arg0: i32, %arg1: i32) -> (i32, i32) {
    %c0_i32 = arith.constant 0 : i32
    %c0_i32_0 = arith.constant 0 : i32
    return %c0_i32, %arg1 : i32, i32
  }
  func.func @transform_4(%arg0: i32, %arg1: i32) -> (i32, i32) {
    %c0_i32 = arith.constant 0 : i32
    %c0_i32_0 = arith.constant 0 : i32
    return %c0_i32, %arg1 : i32, i32
  }
  func.func @transform_5(%arg0: i32, %arg1: i32) -> (i32, i32) {
    %c0_i32 = arith.constant 0 : i32
    return %arg0, %arg1 : i32, i32
  }
  func.func @transform_6(%arg0: i32, %arg1: i32) -> (i32, i32) {
    %c0_i32 = arith.constant 0 : i32
    %c0_i32_0 = arith.constant 0 : i32
    return %arg0, %c0_i32 : i32, i32
  }
}

</mosaic_0001>

<llo_original>
// kernel: fc_classblock.1
$region0: #{fc_classblock.1}
  #allocation0 [shape = 'u32[]', space=smem, size = 0x4, offset = 0x4, fixed_abs, tag = 'smem constant byte address 0x4 - core index']
  #allocation1 [shape = 'u32[144,128]{1,0:T(1,128)}', space=vmem, size = 0x12000, scoped, tag = 'internal scratch']
  #allocation2 [shape = 'f32[8,128]{1,0:T(8,128)}', space=vmem, size = 0x1000, scoped, tag = 'scratch operand']
  %s0 = inlined_call_operand.vmem [shape: f32[8,64], index: 0, kind: input, shape index: {}]
  %s1 = inlined_call_operand.vmem [shape: f32[64,128], index: 1, kind: input, shape index: {}]
  %s2 = inlined_call_operand.vmem [shape: f32[1,128], index: 2, kind: input, shape index: {}]
  %s3 = inlined_call_operand.vmem [shape: f32[128,128], index: 3, kind: input, shape index: {}]
  %s4 = inlined_call_operand.vmem [shape: f32[1,128], index: 4, kind: input, shape index: {}]
  %s5 = inlined_call_operand.hbm [shape: f32[8,128], index: 5, kind: output, shape index: {0}]
  %s6 = inlined_call_operand.hbm [shape: f32[8,128], index: 6, kind: output, shape index: {1}]
  %7 = xla_tuple %s5, %s6
  %s8 = sld [smem:[#allocation0]]
  $region42: #{fc_classblock.1} parent=0
    _
  %s10 = ssub.s32 1, %s8
  %s11 = scalar_select 0, %s10, %s8
  $region1: #{fc_classblock.1} parent=0
    #allocation3 [shape = 'u8[4096]{0}', space=vmem, size = 0x1000, scoped, tag = 'output window, operand 0, single buffered']
    #allocation4 [shape = 's32[1]{0}', space=sflag, size = 0x4, scoped, tag = 'scoped memory for fc_classblock.1']
    #allocation5 [shape = 'u8[4096]{0}', space=vmem, size = 0x1000, scoped, tag = 'output window, operand 1, single buffered']
    #allocation6 [shape = 's32[1]{0}', space=sflag, size = 0x4, scoped, tag = 'scoped memory for fc_classblock.1']
    %12 = vsyncpa [#allocation4], 0
    %13 = vsyncpa [#allocation6], 0
    // Predicated region
    $region2: #{fc_classblock.1} parent=1 // pred_check
      _
    $region3: #{fc_classblock.1} parent=1 // pred_check_branch
      %15 = sbr.rel (0) target = $region5
    $region4: #{fc_classblock.1} parent=1 // pred_region
      _
    $region5: #{fc_classblock.1} parent=1 // pred_fallthru
      _
    // Predicated region
    $region6: #{fc_classblock.1} parent=1 // pred_check
      _
    $region7: #{fc_classblock.1} parent=1 // pred_check_branch
      %17 = sbr.rel (0) target = $region9
    $region8: #{fc_classblock.1} parent=1 // pred_region
      _
    $region9: #{fc_classblock.1} parent=1 // pred_fallthru
      _
    // Predicated region
    $region10: #{fc_classblock.1} parent=1 // pred_check
      _
    $region11: #{fc_classblock.1} parent=1 // pred_check_branch
      %19 = sbr.rel (0) target = $region13
    $region12: #{fc_classblock.1} parent=1 // pred_region
      _
    $region13: #{fc_classblock.1} parent=1 // pred_fallthru
      _
    // Predicated region
    $region14: #{fc_classblock.1} parent=1 // pred_check
      _
    $region15: #{fc_classblock.1} parent=1 // pred_check_branch
      %21 = sbr.rel (0) target = $region17
    $region16: #{fc_classblock.1} parent=1 // pred_region
      _
    $region17: #{fc_classblock.1} parent=1 // pred_fallthru
      _
    // Predicated region
    $region18: #{fc_classblock.1} parent=1 // pred_check
      _
    $region19: #{fc_classblock.1} parent=1 // pred_check_branch
      %23 = sbr.rel (0) target = $region21
    $region20: #{fc_classblock.1} parent=1 // pred_region
      _
    $region21: #{fc_classblock.1} parent=1 // pred_fallthru
      _
    %p24 = scmp.eq.s32.totalorder 0, 0
    // Predicated region
    $region22: #{fc_classblock.1} parent=1 // pred_check
      %p25 = pneg %p24
    $region23: #{fc_classblock.1} parent=1 // pred_check_branch
      %27 = sbr.rel (%p25) target = $region25
    $region24: #{fc_classblock.1} parent=1 // pred_region
      %v28 = vld [vmem:[%s0] sm:$0xff]
      %v29 = vld [vmem:[%s1] sm:$0xff]
      %v30 = vld [vmem:[%s1 + $0x8] sm:$0xff]
      %v31 = vld [vmem:[%s1 + $0x10] sm:$0xff]
      %v32 = vld [vmem:[%s1 + $0x18] sm:$0xff]
      %v33 = vld [vmem:[%s1 + $0x20] sm:$0xff]
      %v34 = vld [vmem:[%s1 + $0x28] sm:$0xff]
      %v35 = vld [vmem:[%s1 + $0x30] sm:$0xff]
      %v36 = vld [vmem:[%s1 + $0x38] sm:$0xff]
      %v37 = vld [vmem:[%s2] sm:$0x1]
      %v39 = vlaneseq
      %v40 = vshrl.u32 %v39, 7
      %v41 = vsub.s32 0, %v40
      %v42 = vrot.slane %v37, %v41
      %vm44 = vcmask 523264
      %v46 = vsel %vm44, %v28, 0
      %48 = vmatprep.subr.mxu0 0.0
      %49 = vmatpush1.msra.mxu0 %v29
      %50 = vmatprep.subr.mxu0 0.0
      %51 = vmatpush1.msra.mxu0 %v30
      %52 = vmatprep.subr.mxu0 0.0
      %53 = vmatpush1.msra.mxu0 %v31
      %54 = vmatprep.subr.mxu0 0.0
      %55 = vmatpush1.msra.mxu0 %v32
      %56 = vmatprep.subr.mxu0 0.0
      %57 = vmatpush1.msra.mxu0 %v33
      %58 = vmatprep.subr.mxu0 0.0
      %59 = vmatpush1.msra.mxu0 %v34
      %60 = vmatprep.subr.mxu0 0.0
      %61 = vmatpush1.msra.mxu0 %v35
      %62 = vmatprep.subr.mxu0 0.0
      %63 = vmatpush1.msra.mxu0 %v36
      %64 = vmatprep.subr.mxu0 0.0
      %65 = vmatpush1.msra.mxu0 0.0
      %66 = vmatprep.subr.mxu0 0.0
      %67 = vmatpush1.msra.mxu0 0.0
      %68 = vmatprep.subr.mxu0 0.0
      %69 = vmatpush1.msra.mxu0 0.0
      %70 = vmatprep.subr.mxu0 0.0
      %71 = vmatpush1.msra.mxu0 0.0
      %72 = vmatprep.subr.mxu0 0.0
      %73 = vmatpush1.msra.mxu0 0.0
      %74 = vmatprep.subr.mxu0 0.0
      %75 = vmatpush1.msra.mxu0 0.0
      %76 = vmatprep.subr.mxu0 0.0
      %77 = vmatpush1.msra.mxu0 0.0
      %78 = vmatprep.subr.mxu0 0.0
      %79 = vmatpush1.msra.mxu0 0.0
      %80 = vmatprep.subr.mxu0 0.0
      %81 = vmatpush1.msra.mxu0 0.0
      %82 = vmatprep.subr.mxu0 0.0
      %83 = vmatpush1.msra.mxu0 0.0
      %84 = vmatprep.subr.mxu0 0.0
      %85 = vmatpush1.msra.mxu0 0.0
      %86 = vmatprep.subr.mxu0 0.0
      %87 = vmatpush1.msra.mxu0 0.0
      %88 = vmatprep.subr.mxu0 0.0
      %89 = vmatpush1.msra.mxu0 0.0
      %90 = vmatprep.subr.mxu0 0.0
      %91 = vmatpush1.msra.mxu0 0.0
      %92 = vmatprep.subr.mxu0 0.0
      %93 = vmatpush1.msra.mxu0 0.0
      %94 = vmatprep.subr.mxu0 0.0
      %95 = vmatpush1.msra.mxu0 0.0
      %96 = vmatprep.subr.mxu0 0.0
      %97 = vmatpush1.msra.mxu0 0.0
      %98 = vmatprep.subr.mxu0 0.0
      %99 = vmatpush1.msra.mxu0 0.0
      %100 = vmatprep.subr.mxu0 0.0
      %101 = vmatpush1.msra.mxu0 0.0
      %102 = vmatprep.subr.mxu0 0.0
      %103 = vmatpush1.msra.mxu0 0.0
      %104 = vmatprep.subr.mxu0 0.0
      %105 = vmatpush1.msra.mxu0 0.0
      %106 = vmatprep.subr.mxu0 0.0
      %107 = vmatpush1.msra.mxu0 0.0
      %108 = vmatprep.subr.mxu0 0.0
      %109 = vmatpush1.msra.mxu0 0.0
      %110 = vmatprep.subr.mxu0 0.0
      %111 = vmatpush1.msra.mxu0 0.0
      %112 = vmatprep.mubr.f32.mxu0 0.0
      %113 = vmatmul.mubr.f32.gmra.mrb[0].mxu0 %v46
      %v114 = vpop.f32.mrb[0].mxu0
      %v115 = vadd.f32 %v42, %v114
      %v116 = vpop.f32.mrb[0].mxu0
      %117 = vdwg.mxu0
      %118 = vst [vmem:[#allocation2] sm:$0xff] %v115
      %v119 = vmul.f32 %v115, %v115
      %120 = vadd.xlane.f32.xlu0 %v119
      %v121 = vpop.xlane.xlu0 %120
      %v122 = vadd.f32 %v121, 1e-16
      %v123 = vrsqrt.pop %v122
      %v124 = vmul.f32 %v115, %v123
      %125 = vst [vmem:[#allocation5] sm:$0xff] %v124
    $region25: #{fc_classblock.1} parent=1 // pred_fallthru
      _
    %v126 = vld [vmem:[#allocation2] sm:$0xff]
    %v127 = vld [vmem:[%s3] sm:$0xff]
    %v128 = vld [vmem:[%s3 + $0x8] sm:$0xff]
    %v129 = vld [vmem:[%s3 + $0x10] sm:$0xff]
    %v130 = vld [vmem:[%s3 + $0x18] sm:$0xff]
    %v131 = vld [vmem:[%s3 + $0x20] sm:$0xff]
    %v132 = vld [vmem:[%s3 + $0x28] sm:$0xff]
    %v133 = vld [vmem:[%s3 + $0x30] sm:$0xff]
    %v134 = vld [vmem:[%s3 + $0x38] sm:$0xff]
    %v135 = vld [vmem:[%s3 + $0x40] sm:$0xff]
    %v136 = vld [vmem:[%s3 + $0x48] sm:$0xff]
    %v137 = vld [vmem:[%s3 + $0x50] sm:$0xff]
    %v138 = vld [vmem:[%s3 + $0x58] sm:$0xff]
    %v139 = vld [vmem:[%s3 + $0x60] sm:$0xff]
    %v140 = vld [vmem:[%s3 + $0x68] sm:$0xff]
    %v141 = vld [vmem:[%s3 + $0x70] sm:$0xff]
    %v142 = vld [vmem:[%s3 + $0x78] sm:$0xff]
    %v143 = vld [vmem:[%s4] sm:$0x1]
    %v145 = vlaneseq
    %v146 = vshrl.u32 %v145, 7
    %v147 = vsub.s32 0, %v146
    %v148 = vrot.slane %v143, %v147
    %150 = vmatprep.subr.mxu0 0.0
    %151 = vmatpush1.msra.mxu0 %v127
    %152 = vmatprep.subr.mxu0 0.0
    %153 = vmatpush1.msra.mxu0 %v128
    %154 = vmatprep.subr.mxu0 0.0
    %155 = vmatpush1.msra.mxu0 %v129
    %156 = vmatprep.subr.mxu0 0.0
    %157 = vmatpush1.msra.mxu0 %v130
    %158 = vmatprep.subr.mxu0 0.0
    %159 = vmatpush1.msra.mxu0 %v131
    %160 = vmatprep.subr.mxu0 0.0
    %161 = vmatpush1.msra.mxu0 %v132
    %162 = vmatprep.subr.mxu0 0.0
    %163 = vmatpush1.msra.mxu0 %v133
    %164 = vmatprep.subr.mxu0 0.0
    %165 = vmatpush1.msra.mxu0 %v134
    %166 = vmatprep.subr.mxu0 0.0
    %167 = vmatpush1.msra.mxu0 %v135
    %168 = vmatprep.subr.mxu0 0.0
    %169 = vmatpush1.msra.mxu0 %v136
    %170 = vmatprep.subr.mxu0 0.0
    %171 = vmatpush1.msra.mxu0 %v137
    %172 = vmatprep.subr.mxu0 0.0
    %173 = vmatpush1.msra.mxu0 %v138
    %174 = vmatprep.subr.mxu0 0.0
    %175 = vmatpush1.msra.mxu0 %v139
    %176 = vmatprep.subr.mxu0 0.0
    %177 = vmatpush1.msra.mxu0 %v140
    %178 = vmatprep.subr.mxu0 0.0
    %179 = vmatpush1.msra.mxu0 %v141
    %180 = vmatprep.subr.mxu0 0.0
    %181 = vmatpush1.msra.mxu0 %v142
    %182 = vmatprep.subr.mxu0 0.0
    %183 = vmatpush1.msra.mxu0 0.0
    %184 = vmatprep.subr.mxu0 0.0
    %185 = vmatpush1.msra.mxu0 0.0
    %186 = vmatprep.subr.mxu0 0.0
    %187 = vmatpush1.msra.mxu0 0.0
    %188 = vmatprep.subr.mxu0 0.0
    %189 = vmatpush1.msra.mxu0 0.0
    %190 = vmatprep.subr.mxu0 0.0
    %191 = vmatpush1.msra.mxu0 0.0
    %192 = vmatprep.subr.mxu0 0.0
    %193 = vmatpush1.msra.mxu0 0.0
    %194 = vmatprep.subr.mxu0 0.0
    %195 = vmatpush1.msra.mxu0 0.0
    %196 = vmatprep.subr.mxu0 0.0
    %197 = vmatpush1.msra.mxu0 0.0
    %198 = vmatprep.subr.mxu0 0.0
    %199 = vmatpush1.msra.mxu0 0.0
    %200 = vmatprep.subr.mxu0 0.0
    %201 = vmatpush1.msra.mxu0 0.0
    %202 = vmatprep.subr.mxu0 0.0
    %203 = vmatpush1.msra.mxu0 0.0
    %204 = vmatprep.subr.mxu0 0.0
    %205 = vmatpush1.msra.mxu0 0.0
    %206 = vmatprep.subr.mxu0 0.0
    %207 = vmatpush1.msra.mxu0 0.0
    %208 = vmatprep.subr.mxu0 0.0
    %209 = vmatpush1.msra.mxu0 0.0
    %210 = vmatprep.subr.mxu0 0.0
    %211 = vmatpush1.msra.mxu0 0.0
    %212 = vmatprep.subr.mxu0 0.0
    %213 = vmatpush1.msra.mxu0 0.0
    %214 = vmatprep.mubr.f32.mxu0 0.0
    %215 = vmatmul.mubr.f32.gmra.mrb[0].mxu0 %v126
    %v216 = vpop.f32.mrb[0].mxu0
    %v217 = vadd.f32 %v148, %v216
    %v218 = vpop.f32.mrb[0].mxu0
    %219 = vdwg.mxu0
    %220 = vst [vmem:[#allocation3] sm:$0xff] %v217
    // Predicated region
    $region26: #{fc_classblock.1} parent=1 // pred_check
      _
    $region27: #{fc_classblock.1} parent=1 // pred_check_branch
      %222 = sbr.rel (0) target = $region29
    $region28: #{fc_classblock.1} parent=1 // pred_region
      %s224 = ssub.s32 128, 128
      %225 = vsyncadd [#allocation4], %s224
      %s227 = sshll.u32 [#allocation3], 4
      %s228 = int_to_ptr.vmem [resolvable:$true] %s227
      %230 = dma.vmem_to_hbm [thread:$0]  %s228, 128, %s5, [#allocation4]
    $region29: #{fc_classblock.1} parent=1 // pred_fallthru
      _
    // Predicated region
    $region30: #{fc_classblock.1} parent=1 // pred_check
      _
    $region31: #{fc_classblock.1} parent=1 // pred_check_branch
      %232 = sbr.rel (0) target = $region33
    $region32: #{fc_classblock.1} parent=1 // pred_region
      %s234 = ssub.s32 128, 128
      %235 = vsyncadd [#allocation6], %s234
      %s237 = sshll.u32 [#allocation5], 4
      %s238 = int_to_ptr.vmem [resolvable:$true] %s237
      %240 = dma.vmem_to_hbm [thread:$0]  %s238, 128, %s6, [#allocation6]
    $region33: #{fc_classblock.1} parent=1 // pred_fallthru
      _
    // Predicated region
    $region34: #{fc_classblock.1} parent=1 // pred_check
      _
    $region35: #{fc_classblock.1} parent=1 // pred_check_branch
      %242 = sbr.rel (0) target = $region37
    $region36: #{fc_classblock.1} parent=1 // pred_region
      %243 = dma.done [#allocation4], 128
    $region37: #{fc_classblock.1} parent=1 // pred_fallthru
      _
    // Predicated region
    $region38: #{fc_classblock.1} parent=1 // pred_check
      _
    $region39: #{fc_classblock.1} parent=1 // pred_check_branch
      %245 = sbr.rel (0) target = $region41
    $region40: #{fc_classblock.1} parent=1 // pred_region
      %246 = dma.done [#allocation6], 128
    $region41: #{fc_classblock.1} parent=1 // pred_fallthru
      _
    %247 = vsyncpa [#allocation4], 1
    %248 = vsyncpa [#allocation6], 1

</llo_original>
